<compile_context>
chip_gen: v5e
topology: v5e:2x2
jax: 0.10.0
libtpu: 0.0.40
codegen_flags: <defaults>
</compile_context>

<pallas_src>
import jax
import jax.numpy as jnp
import numpy as np
from jax.experimental import pallas as pl
from jax.experimental.pallas import tpu as pltpu


def _round_up(x, m):
    return ((x + m - 1) // m) * m


def _posembed_kernel(d_ref, wa_ref, wv_ref, oa_ref, ov_ref):
    # d_ref  : (TM, 3)        scaled relative positions  d = 0.1*(p1 - p0)
    # wa_ref : (1, dim_a)     scalar-channel weights
    # wv_ref : (3, 3*dim_v)   vector-channel weights, row k holds w_v[j] at col 3*j+k
    # oa_ref : (TM, dim_a)    scalar output
    # ov_ref : (TM, 3*dim_v)  vector output, column 3*j+k == (channel j, component k)
    d = d_ref[...]                                     # (TM, 3)
    wa = wa_ref[...]                                   # load once, stays in vregs
    wv = wv_ref[...]
    d0 = d[:, 0:1]                                     # (TM, 1)
    d1 = d[:, 1:2]
    d2 = d[:, 2:3]
    r2 = d0 * d0 + d1 * d1 + d2 * d2                   # (TM, 1), pure VPU
    # Rank-1 updates with (TM,1)*(1,C) broadcasts; unmasked within each block.
    oa_ref[...] = r2 * wa
    ov_ref[...] = d0 * wv[0:1, :] + d1 * wv[1:2, :] + d2 * wv[2:3, :]


def pos_embed(pos_0, pos_1, w_a, w_v, *, tile_m=2048):
    """pos_0, pos_1: (B, N, 3) float32; w_a: (dim_a,); w_v: (dim_v,)."""
    B, N, _ = pos_0.shape
    M = B * N
    dim_a = int(w_a.shape[0])
    dim_v = int(w_v.shape[0])
    Cv = 3 * dim_v

    # Single fused input stream: d = 0.1*(p1 - p0), rows flattened.
    d = (0.1 * (pos_1.astype(jnp.float32) - pos_0.astype(jnp.float32))).reshape(M, 3)

    # Weight tables (built once, wrapper side):
    #   wa : (1, dim_a)
    #   wv : (3, 3*dim_v), wv[k, 3*j + k] = w_v[j]  -> vector output comes out
    #        already interleaved as (dim_v, 3), so the final reshape is free.
    wa = w_a.astype(jnp.float32).reshape(1, dim_a)
    wv = jnp.zeros((3, Cv), dtype=jnp.float32)
    vcols = 3 * jnp.arange(dim_v)
    wvf = w_v.astype(jnp.float32)
    wv = wv.at[0, vcols + 0].set(wvf)
    wv = wv.at[1, vcols + 1].set(wvf)
    wv = wv.at[2, vcols + 2].set(wvf)

    # Large row tiles for pipeline efficiency; clamp for tiny inputs so we do
    # not allocate huge blocks for a handful of rows.
    tm = max(8, min(_round_up(tile_m, 8), _round_up(M, 8)))
    grid = (pl.cdiv(M, tm),)   # ragged last block handled by Pallas masking

    out_a, out_v = pl.pallas_call(
        _posembed_kernel,
        out_shape=(
            jax.ShapeDtypeStruct((M, dim_a), jnp.float32),
            jax.ShapeDtypeStruct((M, Cv), jnp.float32),
        ),
        grid=grid,
        in_specs=[
            pl.BlockSpec((tm, 3), lambda i: (i, 0)),
            pl.BlockSpec((1, dim_a), lambda i: (0, 0)),   # weights stay resident
            pl.BlockSpec((3, Cv), lambda i: (0, 0)),
        ],
        out_specs=(
            pl.BlockSpec((tm, dim_a), lambda i: (i, 0)),
            pl.BlockSpec((tm, Cv), lambda i: (i, 0)),
        ),
        compiler_params=pltpu.CompilerParams(
            dimension_semantics=("parallel",)),          # megacore sharding
    )(d, wa, wv)

    # Row-major-compatible reshapes: no data movement.
    return out_a.reshape(B, N, dim_a), out_v.reshape(B, N, dim_v, 3)


def _reference(pos_0, pos_1, w_a, w_v):
    dpos_v = 0.1 * (pos_1[:, :, None, :] - pos_0[:, :, None, :])   # (B,N,1,3)
    r2 = jnp.sum(dpos_v ** 2, axis=-1)                             # (B,N,1)
    out_a = r2 * w_a[None, None, :]                                # d_in=1 linear
    out_v = w_v[None, None, :, None] * dpos_v                      # (B,N,dim_v,3)
    return out_a, out_v


if __name__ == "__main__":
    B, N = 2, 16
    dim_a, dim_v = 32, 32

    key = jax.random.PRNGKey(0)
    k0, k1, k2, k3 = jax.random.split(key, 4)
    pos_0 = jax.random.normal(k0, (B, N, 3), dtype=jnp.float32)
    pos_1 = jax.random.normal(k1, (B, N, 3), dtype=jnp.float32)
    # Deterministic parameter init (TensLinear weights, d_in = 1).
    w_a = jax.random.normal(k2, (dim_a,), dtype=jnp.float32)
    w_v = jax.random.normal(k3, (dim_v,), dtype=jnp.float32)

    out_a, out_v = pos_embed(pos_0, pos_1, w_a, w_v)
    jax.block_until_ready((out_a, out_v))

    ref_a, ref_v = _reference(pos_0, pos_1, w_a, w_v)
    np.testing.assert_allclose(np.asarray(out_a), np.asarray(ref_a), rtol=1e-6, atol=1e-6)
    np.testing.assert_allclose(np.asarray(out_v), np.asarray(ref_v), rtol=1e-6, atol=1e-6)

    assert out_a.shape == (B, N, dim_a)
    assert out_v.shape == (B, N, dim_v, 3)
    print("KERNEL_OK")
</pallas_src>

<mosaic_0001>
module attributes {stable_mosaic.version = 11 : i64} {
  func.func @_posembed_kernel(%arg0: i32, %arg1: memref<32x3xf32, #tpu.memory_space<vmem>>, %arg2: memref<1x32xf32, #tpu.memory_space<vmem>>, %arg3: memref<3x96xf32, #tpu.memory_space<vmem>>, %arg4: memref<32x32xf32, #tpu.memory_space<vmem>>, %arg5: memref<32x96xf32, #tpu.memory_space<vmem>>) attributes {dimension_semantics = [#tpu.dimension_semantics<parallel>], iteration_bounds = array<i64: 1>, scalar_prefetch = 0 : i64, scratch_operands = 0 : i64, tpu.core_type = #tpu.core_type<tc>, window_params = [{transform_indices = @transform_0, window_bounds = array<i64: 32, 3>}, {pipeline_mode = #tpu.pipeline_mode<synchronous>, transform_indices = @transform_1, window_bounds = array<i64: 1, 32>}, {pipeline_mode = #tpu.pipeline_mode<synchronous>, transform_indices = @transform_2, window_bounds = array<i64: 3, 96>}, {transform_indices = @transform_3, window_bounds = array<i64: 32, 32>}, {transform_indices = @transform_4, window_bounds = array<i64: 32, 96>}]} {
    %c0 = arith.constant 0 : index
    %c0_0 = arith.constant 0 : index
    %0 = vector.load %arg1[%c0, %c0_0] : memref<32x3xf32, #tpu.memory_space<vmem>>, vector<32x3xf32>
    %c0_1 = arith.constant 0 : index
    %c0_2 = arith.constant 0 : index
    %1 = vector.load %arg2[%c0_1, %c0_2] : memref<1x32xf32, #tpu.memory_space<vmem>>, vector<1x32xf32>
    %c0_3 = arith.constant 0 : index
    %c0_4 = arith.constant 0 : index
    %2 = vector.load %arg3[%c0_3, %c0_4] : memref<3x96xf32, #tpu.memory_space<vmem>>, vector<3x96xf32>
    %3 = vector.extract_strided_slice %0 {offsets = [0, 0], sizes = [32, 1], strides = [1, 1]} : vector<32x3xf32> to vector<32x1xf32>
    %4 = vector.extract_strided_slice %0 {offsets = [0, 1], sizes = [32, 1], strides = [1, 1]} : vector<32x3xf32> to vector<32x1xf32>
    %5 = vector.extract_strided_slice %0 {offsets = [0, 2], sizes = [32, 1], strides = [1, 1]} : vector<32x3xf32> to vector<32x1xf32>
    %6 = arith.mulf %3, %3 : vector<32x1xf32>
    %7 = arith.mulf %4, %4 : vector<32x1xf32>
    %8 = arith.addf %6, %7 : vector<32x1xf32>
    %9 = arith.mulf %5, %5 : vector<32x1xf32>
    %10 = arith.addf %8, %9 : vector<32x1xf32>
    %11 = vector.broadcast %10 : vector<32x1xf32> to vector<32x32xf32>
    %12 = vector.broadcast %1 : vector<1x32xf32> to vector<32x32xf32>
    %13 = arith.mulf %11, %12 : vector<32x32xf32>
    %c0_5 = arith.constant 0 : index
    %c0_6 = arith.constant 0 : index
    %14 = vector.load %arg4[%c0_5, %c0_6] : memref<32x32xf32, #tpu.memory_space<vmem>>, vector<32x32xf32>
    tpu.vector_store %arg4[%c0_5, %c0_6], %13 {strides = array<i32>} : memref<32x32xf32, #tpu.memory_space<vmem>>, vector<32x32xf32>,
    %15 = vector.extract_strided_slice %2 {offsets = [0, 0], sizes = [1, 96], strides = [1, 1]} : vector<3x96xf32> to vector<1x96xf32>
    %16 = vector.broadcast %3 : vector<32x1xf32> to vector<32x96xf32>
    %17 = vector.broadcast %15 : vector<1x96xf32> to vector<32x96xf32>
    %18 = arith.mulf %16, %17 : vector<32x96xf32>
    %19 = vector.extract_strided_slice %2 {offsets = [1, 0], sizes = [1, 96], strides = [1, 1]} : vector<3x96xf32> to vector<1x96xf32>
    %20 = vector.broadcast %4 : vector<32x1xf32> to vector<32x96xf32>
    %21 = vector.broadcast %19 : vector<1x96xf32> to vector<32x96xf32>
    %22 = arith.mulf %20, %21 : vector<32x96xf32>
    %23 = arith.addf %18, %22 : vector<32x96xf32>
    %24 = vector.extract_strided_slice %2 {offsets = [2, 0], sizes = [1, 96], strides = [1, 1]} : vector<3x96xf32> to vector<1x96xf32>
    %25 = vector.broadcast %5 : vector<32x1xf32> to vector<32x96xf32>
    %26 = vector.broadcast %24 : vector<1x96xf32> to vector<32x96xf32>
    %27 = arith.mulf %25, %26 : vector<32x96xf32>
    %28 = arith.addf %23, %27 : vector<32x96xf32>
    %c0_7 = arith.constant 0 : index
    %c0_8 = arith.constant 0 : index
    %29 = vector.load %arg5[%c0_7, %c0_8] : memref<32x96xf32, #tpu.memory_space<vmem>>, vector<32x96xf32>
    tpu.vector_store %arg5[%c0_7, %c0_8], %28 {strides = array<i32>} : memref<32x96xf32, #tpu.memory_space<vmem>>, vector<32x96xf32>,
    return
  }
  func.func @transform_0(%arg0: i32) -> (i32, i32) {
    %c0_i32 = arith.constant 0 : i32
    %c0_i32_0 = arith.constant 0 : i32
    return %arg0, %c0_i32 : i32, i32
  }
  func.func @transform_1(%arg0: i32) -> (i32, i32) {
    %c0_i32 = arith.constant 0 : i32
    %c0_i32_0 = arith.constant 0 : i32
    %c0_i32_1 = arith.constant 0 : i32
    return %c0_i32, %c0_i32_0 : i32, i32
  }
  func.func @transform_2(%arg0: i32) -> (i32, i32) {
    %c0_i32 = arith.constant 0 : i32
    %c0_i32_0 = arith.constant 0 : i32
    %c0_i32_1 = arith.constant 0 : i32
    return %c0_i32, %c0_i32_0 : i32, i32
  }
  func.func @transform_3(%arg0: i32) -> (i32, i32) {
    %c0_i32 = arith.constant 0 : i32
    %c0_i32_0 = arith.constant 0 : i32
    return %arg0, %c0_i32 : i32, i32
  }
  func.func @transform_4(%arg0: i32) -> (i32, i32) {
    %c0_i32 = arith.constant 0 : i32
    %c0_i32_0 = arith.constant 0 : i32
    return %arg0, %c0_i32 : i32, i32
  }
}

</mosaic_0001>

<llo_original>
// kernel: tpu_custom_call.1
$region0: #{tpu_custom_call.1}
  #allocation0 [shape = 'u32[]', space=smem, size = 0x4, offset = 0x4, fixed_abs, tag = 'smem constant byte address 0x4 - core index']
  #allocation1 [shape = 'u32[72,128]{1,0:T(1,128)}', space=vmem, size = 0x9000, scoped, tag = 'internal scratch']
  %s0 = inlined_call_operand.vmem [shape: f32[32,3], index: 0, kind: input, shape index: {}]
  %s1 = inlined_call_operand.vmem [shape: f32[1,32], index: 1, kind: input, shape index: {}]
  %s2 = inlined_call_operand.vmem [shape: f32[3,96], index: 2, kind: input, shape index: {}]
  %s3 = inlined_call_operand.hbm [shape: f32[32,32], index: 3, kind: output, shape index: {0}]
  %s4 = inlined_call_operand.hbm [shape: f32[32,96], index: 4, kind: output, shape index: {1}]
  %5 = xla_tuple %s3, %s4
  %s6 = sld [smem:[#allocation0]]
  $region30: #{tpu_custom_call.1} parent=0
    _
  %s8 = ssub.s32 1, %s6
  %s9 = scalar_select 0, %s8, %s6
  $region1: #{tpu_custom_call.1} parent=0
    #allocation2 [shape = 'u8[16384]{0}', space=vmem, size = 0x4000, scoped, tag = 'output window, operand 0, single buffered']
    #allocation3 [shape = 's32[1]{0}', space=sflag, size = 0x4, scoped, tag = 'scoped memory for tpu_custom_call.1']
    #allocation4 [shape = 'u8[16384]{0}', space=vmem, size = 0x4000, scoped, tag = 'output window, operand 1, single buffered']
    #allocation5 [shape = 's32[1]{0}', space=sflag, size = 0x4, scoped, tag = 'scoped memory for tpu_custom_call.1']
    %10 = vsyncpa [#allocation3], 0
    %11 = vsyncpa [#allocation5], 0
    // Predicated region
    $region2: #{tpu_custom_call.1} parent=1 // pred_check
      _
    $region3: #{tpu_custom_call.1} parent=1 // pred_check_branch
      %13 = sbr.rel (0) target = $region5
    $region4: #{tpu_custom_call.1} parent=1 // pred_region
      _
    $region5: #{tpu_custom_call.1} parent=1 // pred_fallthru
      _
    // Predicated region
    $region6: #{tpu_custom_call.1} parent=1 // pred_check
      _
    $region7: #{tpu_custom_call.1} parent=1 // pred_check_branch
      %15 = sbr.rel (0) target = $region9
    $region8: #{tpu_custom_call.1} parent=1 // pred_region
      _
    $region9: #{tpu_custom_call.1} parent=1 // pred_fallthru
      _
    // Predicated region
    $region10: #{tpu_custom_call.1} parent=1 // pred_check
      _
    $region11: #{tpu_custom_call.1} parent=1 // pred_check_branch
      %17 = sbr.rel (0) target = $region13
    $region12: #{tpu_custom_call.1} parent=1 // pred_region
      _
    $region13: #{tpu_custom_call.1} parent=1 // pred_fallthru
      _
    %v18 = vld [vmem:[%s0] sm:$0xff]
    %v19 = vld [vmem:[%s0 + $0x8] sm:$0xff]
    %v20 = vld [vmem:[%s0 + $0x10] sm:$0xff]
    %v21 = vld [vmem:[%s0 + $0x18] sm:$0xff]
    %v22 = vld [vmem:[%s1] sm:$0x1]
    %v23 = vld [vmem:[%s2] sm:$0x7]
    %v24 = vmul.f32 %v18, %v18
    %v25 = vmul.f32 %v19, %v19
    %v26 = vmul.f32 %v20, %v20
    %v27 = vmul.f32 %v21, %v21
    %32 = vrot.lane.b32.xlu0 %v24, 127
    %v33 = vpop.permute.xlu0 %32
    %34 = vrot.lane.b32.xlu0 %v25, 127
    %v35 = vpop.permute.xlu0 %34
    %36 = vrot.lane.b32.xlu0 %v26, 127
    %v37 = vpop.permute.xlu0 %36
    %38 = vrot.lane.b32.xlu0 %v27, 127
    %v39 = vpop.permute.xlu0 %38
    %v44 = vadd.f32 %v24, %v33
    %v45 = vadd.f32 %v25, %v35
    %v46 = vadd.f32 %v26, %v37
    %v47 = vadd.f32 %v27, %v39
    %48 = vrot.lane.b32.xlu0 %v24, 126
    %v49 = vpop.permute.xlu0 %48
    %50 = vrot.lane.b32.xlu0 %v25, 126
    %v51 = vpop.permute.xlu0 %50
    %52 = vrot.lane.b32.xlu0 %v26, 126
    %v53 = vpop.permute.xlu0 %52
    %54 = vrot.lane.b32.xlu0 %v27, 126
    %v55 = vpop.permute.xlu0 %54
    %v60 = vadd.f32 %v44, %v49
    %v61 = vadd.f32 %v45, %v51
    %v62 = vadd.f32 %v46, %v53
    %v63 = vadd.f32 %v47, %v55
    %65 = vset.pattern.permute.xlu0 0
    %66 = vperm.xlu0 %65, %v60
    %v67 = vpop.permute.xlu0 %66
    %70 = vset.pattern.permute.xlu0 0
    %71 = vperm.xlu0 %70, %v61
    %v72 = vpop.permute.xlu0 %71
    %75 = vset.pattern.permute.xlu0 0
    %76 = vperm.xlu0 %75, %v62
    %v77 = vpop.permute.xlu0 %76
    %80 = vset.pattern.permute.xlu0 0
    %81 = vperm.xlu0 %80, %v63
    %v82 = vpop.permute.xlu0 %81
    %v85 = vperm.slane %v22, 0
    %v87 = vmul.f32 %v67, %v85
    %v88 = vmul.f32 %v72, %v85
    %v89 = vmul.f32 %v77, %v85
    %v90 = vmul.f32 %v82, %v85
    %vm91 = vcmask 261120
    %92 = vst.msk [vmem:[#allocation2] sm:$0xff] %vm91, %v87
    %93 = vst.msk [vmem:[#allocation2 + $0x8] sm:$0xff] %vm91, %v88
    %94 = vst.msk [vmem:[#allocation2 + $0x10] sm:$0xff] %vm91, %v89
    %95 = vst.msk [vmem:[#allocation2 + $0x18] sm:$0xff] %vm91, %v90
    %97 = vset.pattern.permute.xlu0 0
    %98 = vperm.xlu0 %97, %v18
    %v99 = vpop.permute.xlu0 %98
    %102 = vset.pattern.permute.xlu0 0
    %103 = vperm.xlu0 %102, %v19
    %v104 = vpop.permute.xlu0 %103
    %107 = vset.pattern.permute.xlu0 0
    %108 = vperm.xlu0 %107, %v20
    %v109 = vpop.permute.xlu0 %108
    %112 = vset.pattern.permute.xlu0 0
    %113 = vperm.xlu0 %112, %v21
    %v114 = vpop.permute.xlu0 %113
    %v116 = vperm.slane %v23, 0
    %v117 = vmul.f32 %v99, %v116
    %v118 = vmul.f32 %v104, %v116
    %v119 = vmul.f32 %v109, %v116
    %v120 = vmul.f32 %v114, %v116
    %121 = vset.pattern.permute.xlu0 1
    %122 = vperm.xlu0 %121, %v18
    %v123 = vpop.permute.xlu0 %122
    %125 = vset.pattern.permute.xlu0 1
    %126 = vperm.xlu0 %125, %v19
    %v127 = vpop.permute.xlu0 %126
    %129 = vset.pattern.permute.xlu0 1
    %130 = vperm.xlu0 %129, %v20
    %v131 = vpop.permute.xlu0 %130
    %133 = vset.pattern.permute.xlu0 1
    %134 = vperm.xlu0 %133, %v21
    %v135 = vpop.permute.xlu0 %134
    %v137 = vperm.slane %v23, 1
    %v138 = vmul.f32 %v123, %v137
    %v139 = vmul.f32 %v127, %v137
    %v140 = vmul.f32 %v131, %v137
    %v141 = vmul.f32 %v135, %v137
    %v142 = vadd.f32 %v117, %v138
    %v143 = vadd.f32 %v118, %v139
    %v144 = vadd.f32 %v119, %v140
    %v145 = vadd.f32 %v120, %v141
    %146 = vset.pattern.permute.xlu0 2
    %147 = vperm.xlu0 %146, %v18
    %v148 = vpop.permute.xlu0 %147
    %150 = vset.pattern.permute.xlu0 2
    %151 = vperm.xlu0 %150, %v19
    %v152 = vpop.permute.xlu0 %151
    %154 = vset.pattern.permute.xlu0 2
    %155 = vperm.xlu0 %154, %v20
    %v156 = vpop.permute.xlu0 %155
    %158 = vset.pattern.permute.xlu0 2
    %159 = vperm.xlu0 %158, %v21
    %v160 = vpop.permute.xlu0 %159
    %v162 = vperm.slane %v23, 2
    %v163 = vmul.f32 %v148, %v162
    %v164 = vmul.f32 %v152, %v162
    %v165 = vmul.f32 %v156, %v162
    %v166 = vmul.f32 %v160, %v162
    %v167 = vadd.f32 %v142, %v163
    %v168 = vadd.f32 %v143, %v164
    %v169 = vadd.f32 %v144, %v165
    %v170 = vadd.f32 %v145, %v166
    %vm171 = vcmask 785408
    %172 = vst.msk [vmem:[#allocation4] sm:$0xff] %vm171, %v167
    %173 = vst.msk [vmem:[#allocation4 + $0x8] sm:$0xff] %vm171, %v168
    %174 = vst.msk [vmem:[#allocation4 + $0x10] sm:$0xff] %vm171, %v169
    %175 = vst.msk [vmem:[#allocation4 + $0x18] sm:$0xff] %vm171, %v170
    // Predicated region
    $region14: #{tpu_custom_call.1} parent=1 // pred_check
      _
    $region15: #{tpu_custom_call.1} parent=1 // pred_check_branch
      %177 = sbr.rel (0) target = $region17
    $region16: #{tpu_custom_call.1} parent=1 // pred_region
      %179 = vsyncadd [#allocation3], 0
      %s180 = sshll.u32 [#allocation2], 4
      %s181 = int_to_ptr.vmem [resolvable:$true] %s180
      %s182 = sshll.u32 %s3, 4
      %s183 = int_to_ptr.hbm [resolvable:$true] %s182
      %188 = dma.vmem_to_hbm [thread:$0]  %s181, 512, %s183, [#allocation3], 128, 128, 8
    $region17: #{tpu_custom_call.1} parent=1 // pred_fallthru
      _
    // Predicated region
    $region18: #{tpu_custom_call.1} parent=1 // pred_check
      _
    $region19: #{tpu_custom_call.1} parent=1 // pred_check_branch
      %190 = sbr.rel (0) target = $region21
    $region20: #{tpu_custom_call.1} parent=1 // pred_region
      %192 = vsyncadd [#allocation5], 0
      %s193 = sshll.u32 [#allocation4], 4
      %s194 = int_to_ptr.vmem [resolvable:$true] %s193
      %s195 = sshll.u32 %s4, 4
      %s196 = int_to_ptr.hbm [resolvable:$true] %s195
      %201 = dma.vmem_to_hbm [thread:$0]  %s194, 512, %s196, [#allocation5], 128, 128, 8
    $region21: #{tpu_custom_call.1} parent=1 // pred_fallthru
      _
    // Predicated region
    $region22: #{tpu_custom_call.1} parent=1 // pred_check
      _
    $region23: #{tpu_custom_call.1} parent=1 // pred_check_branch
      %203 = sbr.rel (0) target = $region25
    $region24: #{tpu_custom_call.1} parent=1 // pred_region
      %205 = dma.done [#allocation3], 512
    $region25: #{tpu_custom_call.1} parent=1 // pred_fallthru
      _
    // Predicated region
    $region26: #{tpu_custom_call.1} parent=1 // pred_check
      _
    $region27: #{tpu_custom_call.1} parent=1 // pred_check_branch
      %207 = sbr.rel (0) target = $region29
    $region28: #{tpu_custom_call.1} parent=1 // pred_region
      %209 = dma.done [#allocation5], 512
    $region29: #{tpu_custom_call.1} parent=1 // pred_fallthru
      _
    %210 = vsyncpa [#allocation3], 1
    %211 = vsyncpa [#allocation5], 1

</llo_original>
